<compile_context>
chip_gen: v5e
topology: v5e:2x2
jax: 0.10.0
libtpu: 0.0.40
codegen_flags: <defaults>
</compile_context>

<pallas_src>
import jax
import jax.numpy as jnp
import numpy as np
from jax.experimental import pallas as pl
from jax.experimental.pallas import tpu as pltpu


def rd_fused_kernel(wr_ref, wd_ref, br_ref, bd_ref, x_ref, out_ref):
    """Fused forward for K stacked reaction_diffusion_fast modules.

    wr_ref / wd_ref : (N, K*N)   columns = rows of L_react / L_diff per kernel
    br_ref / bd_ref : (1, K*N)   biases, flattened per kernel
    x_ref           : (B, N)
    out_ref         : (B, K*N)   torch.cat(outputs, dim=-1)
    """
    x = x_ref[...]                                                    # (B, N)
    # x @ L^T for all K kernels in one MXU pass per branch.
    reaction = jnp.dot(x, wr_ref[...], preferred_element_type=jnp.float32) + br_ref[...]
    diffusion = jnp.dot(x, wd_ref[...], preferred_element_type=jnp.float32) + bd_ref[...]
    # up and down  ->  tanh(reaction) + diffusion
    out_ref[...] = jnp.tanh(reaction) + diffusion


def multi_rd_forward(t, x, wr, wd, br, bd, mask):
    """Pallas implementation of K concatenated reaction_diffusion_fast forwards.

    t is unused (matches the PyTorch forward signature).
    x: (B, N); wr, wd: (K, N, N); br, bd: (K, 1, N); mask: (N, N).
    Returns (B, K*N)  ==  torch.cat([rd_k(x) for k in range(K)], dim=-1).
    """
    del t
    K, N, _ = wr.shape
    B = x.shape[0]
    KN = K * N

    # ---- x-independent parameter prep (done once, XLA-fused) ----------------
    a_r = wr * mask[None]                    # reaction_element = W_r * mask
    a_d = wd * jnp.transpose(mask)[None]     # diffusion_element = W_d * mask^T
    s_r = jnp.sum(a_r, axis=2)               # rowsums (K, N)
    s_d = jnp.sum(a_d, axis=2)
    eye = jnp.eye(N, dtype=x.dtype)
    L_r = s_r[:, :, None] * eye - a_r        # (K, N, N)  L = diag(rowsum) - A
    L_d = s_d[:, :, None] * eye - a_d
    # Column-stack the transposed Laplacians so the kernel computes x @ L^T
    # for all K kernels with one dot: W[m, k*N + n] = L[k, n, m].
    w_r = jnp.transpose(L_r, (2, 0, 1)).reshape(N, KN)
    w_d = jnp.transpose(L_d, (2, 0, 1)).reshape(N, KN)
    b_r = br.reshape(1, KN)
    b_d = bd.reshape(1, KN)

    cost = pl.CostEstimate(
        flops=2 * 2 * B * N * KN,
        transcendentals=B * KN,
        bytes_accessed=4 * (2 * N * KN + 2 * KN + B * N + B * KN),
    )

    return pl.pallas_call(
        rd_fused_kernel,
        out_shape=jax.ShapeDtypeStruct((B, KN), jnp.float32),
        grid=(1,),
        in_specs=[
            pl.BlockSpec((N, KN), lambda i: (0, 0)),   # stacked L_react^T
            pl.BlockSpec((N, KN), lambda i: (0, 0)),   # stacked L_diff^T
            pl.BlockSpec((1, KN), lambda i: (0, 0)),   # bias_reaction (flat)
            pl.BlockSpec((1, KN), lambda i: (0, 0)),   # bias_diffusion (flat)
            pl.BlockSpec((B, N), lambda i: (0, 0)),    # x
        ],
        out_specs=pl.BlockSpec((B, KN), lambda i: (0, 0)),
        cost_estimate=cost,
        compiler_params=pltpu.CompilerParams(dimension_semantics=("arbitrary",)),
    )(w_r, w_d, b_r, b_d, x)


def reference_forward(x, wr, wd, br, bd, mask):
    """Pure-JAX reference mirroring the PyTorch forward (for validation)."""
    outs = []
    K = wr.shape[0]
    for k in range(K):
        a_r = wr[k] * mask
        a_d = wd[k] * mask.T
        L_r = jnp.diag(jnp.sum(a_r, axis=1)) - a_r
        L_d = jnp.diag(jnp.sum(a_d, axis=1)) - a_d
        reaction = jnp.matmul(L_r, x[:, :, None])[:, :, 0] + br[k]    # (B, N)
        diffusion = jnp.matmul(L_d, x[:, :, None])[:, :, 0] + bd[k]   # (B, N)
        outs.append(jnp.tanh(reaction) + diffusion)
    return jnp.concatenate(outs, axis=-1)


if __name__ == "__main__":
    B, N = 2, 16               # batch, num_node
    num_rd_kernels = 4
    num_ex_kernels = max(num_rd_kernels - 2, 0)

    # Deterministic synthetic adjacency (replaces the CSV adj_path).
    mask_np = np.zeros((N, N), dtype=np.float32)
    for i in range(N):
        mask_np[i, (i + 1) % N] = 1.0
        mask_np[i, (i + 5) % N] = 1.0
    mask = jnp.asarray(mask_np)

    # Unique RD sub-modules used by forward():
    #   num_ex_kernels extra kernels (scale = 10/num_rd_kernels * i) + transient (scale 0.9).
    # The transient module is appended TWICE in the output (as in the torch code).
    unique_scales = [10.0 / num_rd_kernels * i for i in range(num_ex_kernels)] + [0.9]
    key = jax.random.PRNGKey(0)
    keys = jax.random.split(key, 4 * len(unique_scales) + 1)
    x_key, pkeys = keys[0], keys[1:]

    wr_list, wd_list, br_list, bd_list = [], [], [], []
    for idx, s in enumerate(unique_scales):
        k0, k1, k2, k3 = pkeys[4 * idx: 4 * idx + 4]
        wr_list.append(s * jax.random.normal(k0, (N, N), jnp.float32) / 10.0)
        wd_list.append(s * jax.random.normal(k1, (N, N), jnp.float32) / 10.0)
        br_list.append(s * jax.random.normal(k2, (N, 1), jnp.float32) / 10.0)  # bias_reaction (N,1)
        bd_list.append(s * jax.random.normal(k3, (N, 1), jnp.float32) / 10.0)  # bias_diffusion (N,1)

    # Output order: extra kernels, then rdgcn_transient twice (shared weights).
    order = list(range(num_ex_kernels)) + [num_ex_kernels, num_ex_kernels]
    K = len(order)
    wr = jnp.stack([wr_list[i] for i in order])                       # (K, N, N)
    wd = jnp.stack([wd_list[i] for i in order])                       # (K, N, N)
    br = jnp.stack([br_list[i].reshape(1, N) for i in order])         # (K, 1, N)
    bd = jnp.stack([bd_list[i].reshape(1, N) for i in order])         # (K, 1, N)
    br_ref = jnp.stack([br_list[i][:, 0] for i in order])             # (K, N) for reference
    bd_ref = jnp.stack([bd_list[i][:, 0] for i in order])             # (K, N)

    x = jax.random.normal(x_key, (B, N), jnp.float32)
    t = jnp.float32(0.0)   # unused, matches forward(t, input)

    forward = jax.jit(multi_rd_forward)
    out = forward(t, x, wr, wd, br, bd, mask)
    out = jax.block_until_ready(out)

    ref = reference_forward(x, wr, wd, br_ref, bd_ref, mask)
    np.testing.assert_allclose(np.asarray(out), np.asarray(ref), rtol=1e-5, atol=1e-5)
    assert out.shape == (B, K * N)

    print("KERNEL_OK")
</pallas_src>

<mosaic_0001>
module attributes {stable_mosaic.version = 11 : i64} {
  func.func @rd_fused_kernel(%arg0: i32, %arg1: memref<16x64xf32, #tpu.memory_space<vmem>>, %arg2: memref<16x64xf32, #tpu.memory_space<vmem>>, %arg3: memref<1x64xf32, #tpu.memory_space<vmem>>, %arg4: memref<1x64xf32, #tpu.memory_space<vmem>>, %arg5: memref<2x16xf32, #tpu.memory_space<vmem>>, %arg6: memref<2x64xf32, #tpu.memory_space<vmem>>) attributes {dimension_semantics = [#tpu.dimension_semantics<arbitrary>], iteration_bounds = array<i64: 1>, scalar_prefetch = 0 : i64, scratch_operands = 0 : i64, tpu.core_type = #tpu.core_type<tc>, window_params = [{pipeline_mode = #tpu.pipeline_mode<synchronous>, transform_indices = @transform_0, window_bounds = array<i64: 16, 64>}, {pipeline_mode = #tpu.pipeline_mode<synchronous>, transform_indices = @transform_1, window_bounds = array<i64: 16, 64>}, {pipeline_mode = #tpu.pipeline_mode<synchronous>, transform_indices = @transform_2, window_bounds = array<i64: 1, 64>}, {pipeline_mode = #tpu.pipeline_mode<synchronous>, transform_indices = @transform_3, window_bounds = array<i64: 1, 64>}, {pipeline_mode = #tpu.pipeline_mode<synchronous>, transform_indices = @transform_4, window_bounds = array<i64: 2, 16>}, {pipeline_mode = #tpu.pipeline_mode<synchronous>, transform_indices = @transform_5, window_bounds = array<i64: 2, 64>}]} {
    %c0 = arith.constant 0 : index
    %c0_0 = arith.constant 0 : index
    %0 = vector.load %arg5[%c0, %c0_0] : memref<2x16xf32, #tpu.memory_space<vmem>>, vector<2x16xf32>
    %c0_1 = arith.constant 0 : index
    %c0_2 = arith.constant 0 : index
    %1 = vector.load %arg1[%c0_1, %c0_2] : memref<16x64xf32, #tpu.memory_space<vmem>>, vector<16x64xf32>
    %cst = arith.constant dense<0.000000e+00> : vector<2x64xf32>
    %2 = tpu.matmul %0, %1, %cst {dimension_numbers = #tpu.dot_dimension_numbers<[1], [0], [0], [1], [0, 0, 1, 1], [], []>} : vector<2x16xf32>, vector<16x64xf32>, vector<2x64xf32> -> vector<2x64xf32>
    %c0_3 = arith.constant 0 : index
    %c0_4 = arith.constant 0 : index
    %3 = vector.load %arg3[%c0_3, %c0_4] : memref<1x64xf32, #tpu.memory_space<vmem>>, vector<1x64xf32>
    %4 = vector.broadcast %3 : vector<1x64xf32> to vector<2x64xf32>
    %5 = arith.addf %2, %4 : vector<2x64xf32>
    %c0_5 = arith.constant 0 : index
    %c0_6 = arith.constant 0 : index
    %6 = vector.load %arg2[%c0_5, %c0_6] : memref<16x64xf32, #tpu.memory_space<vmem>>, vector<16x64xf32>
    %cst_7 = arith.constant dense<0.000000e+00> : vector<2x64xf32>
    %7 = tpu.matmul %0, %6, %cst_7 {dimension_numbers = #tpu.dot_dimension_numbers<[1], [0], [0], [1], [0, 0, 1, 1], [], []>} : vector<2x16xf32>, vector<16x64xf32>, vector<2x64xf32> -> vector<2x64xf32>
    %c0_8 = arith.constant 0 : index
    %c0_9 = arith.constant 0 : index
    %8 = vector.load %arg4[%c0_8, %c0_9] : memref<1x64xf32, #tpu.memory_space<vmem>>, vector<1x64xf32>
    %9 = vector.broadcast %8 : vector<1x64xf32> to vector<2x64xf32>
    %10 = arith.addf %7, %9 : vector<2x64xf32>
    %11 = math.tanh %5 : vector<2x64xf32>
    %12 = arith.addf %11, %10 : vector<2x64xf32>
    %c0_10 = arith.constant 0 : index
    %c0_11 = arith.constant 0 : index
    %13 = vector.load %arg6[%c0_10, %c0_11] : memref<2x64xf32, #tpu.memory_space<vmem>>, vector<2x64xf32>
    tpu.vector_store %arg6[%c0_10, %c0_11], %12 {strides = array<i32>} : memref<2x64xf32, #tpu.memory_space<vmem>>, vector<2x64xf32>,
    return
  }
  func.func @transform_0(%arg0: i32) -> (i32, i32) {
    %c0_i32 = arith.constant 0 : i32
    %c0_i32_0 = arith.constant 0 : i32
    %c0_i32_1 = arith.constant 0 : i32
    return %c0_i32, %c0_i32_0 : i32, i32
  }
  func.func @transform_1(%arg0: i32) -> (i32, i32) {
    %c0_i32 = arith.constant 0 : i32
    %c0_i32_0 = arith.constant 0 : i32
    %c0_i32_1 = arith.constant 0 : i32
    return %c0_i32, %c0_i32_0 : i32, i32
  }
  func.func @transform_2(%arg0: i32) -> (i32, i32) {
    %c0_i32 = arith.constant 0 : i32
    %c0_i32_0 = arith.constant 0 : i32
    %c0_i32_1 = arith.constant 0 : i32
    return %c0_i32, %c0_i32_0 : i32, i32
  }
  func.func @transform_3(%arg0: i32) -> (i32, i32) {
    %c0_i32 = arith.constant 0 : i32
    %c0_i32_0 = arith.constant 0 : i32
    %c0_i32_1 = arith.constant 0 : i32
    return %c0_i32, %c0_i32_0 : i32, i32
  }
  func.func @transform_4(%arg0: i32) -> (i32, i32) {
    %c0_i32 = arith.constant 0 : i32
    %c0_i32_0 = arith.constant 0 : i32
    %c0_i32_1 = arith.constant 0 : i32
    return %c0_i32, %c0_i32_0 : i32, i32
  }
  func.func @transform_5(%arg0: i32) -> (i32, i32) {
    %c0_i32 = arith.constant 0 : i32
    %c0_i32_0 = arith.constant 0 : i32
    %c0_i32_1 = arith.constant 0 : i32
    return %c0_i32, %c0_i32_0 : i32, i32
  }
}

</mosaic_0001>

<llo_original>
// kernel: multi_rd_forward.1
$region0: #{multi_rd_forward.1}
  #allocation0 [shape = 'u32[]', space=smem, size = 0x4, offset = 0x4, fixed_abs, tag = 'smem constant byte address 0x4 - core index']
  #allocation1 [shape = 'u32[72,128]{1,0:T(1,128)}', space=vmem, size = 0x9000, scoped, tag = 'internal scratch']
  %s0 = inlined_call_operand.vmem [shape: f32[16,64], index: 0, kind: input, shape index: {}]
  %s1 = inlined_call_operand.vmem [shape: f32[16,64], index: 1, kind: input, shape index: {}]
  %s2 = inlined_call_operand.vmem [shape: f32[1,64], index: 2, kind: input, shape index: {}]
  %s3 = inlined_call_operand.vmem [shape: f32[1,64], index: 3, kind: input, shape index: {}]
  %s4 = inlined_call_operand.vmem [shape: f32[2,16], index: 4, kind: input, shape index: {}]
  %s5 = inlined_call_operand.hbm [shape: f32[2,64], index: 5, kind: output, shape index: {}]
  %s6 = sld [smem:[#allocation0]]
  $region30: #{multi_rd_forward.1} parent=0
    _
  %s8 = ssub.s32 1, %s6
  %s9 = scalar_select 0, %s8, %s6
  $region1: #{multi_rd_forward.1} parent=0
    #allocation2 [shape = 'u8[1024]{0}', space=vmem, size = 0x400, scoped, tag = 'output window, operand 0, single buffered']
    #allocation3 [shape = 's32[1]{0}', space=sflag, size = 0x4, scoped, tag = 'scoped memory for multi_rd_forward.1']
    %10 = vsyncpa [#allocation3], 0
    // Predicated region
    $region2: #{multi_rd_forward.1} parent=1 // pred_check
      _
    $region3: #{multi_rd_forward.1} parent=1 // pred_check_branch
      %12 = sbr.rel (0) target = $region5
    $region4: #{multi_rd_forward.1} parent=1 // pred_region
      _
    $region5: #{multi_rd_forward.1} parent=1 // pred_fallthru
      _
    // Predicated region
    $region6: #{multi_rd_forward.1} parent=1 // pred_check
      _
    $region7: #{multi_rd_forward.1} parent=1 // pred_check_branch
      %14 = sbr.rel (0) target = $region9
    $region8: #{multi_rd_forward.1} parent=1 // pred_region
      _
    $region9: #{multi_rd_forward.1} parent=1 // pred_fallthru
      _
    // Predicated region
    $region10: #{multi_rd_forward.1} parent=1 // pred_check
      _
    $region11: #{multi_rd_forward.1} parent=1 // pred_check_branch
      %16 = sbr.rel (0) target = $region13
    $region12: #{multi_rd_forward.1} parent=1 // pred_region
      _
    $region13: #{multi_rd_forward.1} parent=1 // pred_fallthru
      _
    // Predicated region
    $region14: #{multi_rd_forward.1} parent=1 // pred_check
      _
    $region15: #{multi_rd_forward.1} parent=1 // pred_check_branch
      %18 = sbr.rel (0) target = $region17
    $region16: #{multi_rd_forward.1} parent=1 // pred_region
      _
    $region17: #{multi_rd_forward.1} parent=1 // pred_fallthru
      _
    // Predicated region
    $region18: #{multi_rd_forward.1} parent=1 // pred_check
      _
    $region19: #{multi_rd_forward.1} parent=1 // pred_check_branch
      %20 = sbr.rel (0) target = $region21
    $region20: #{multi_rd_forward.1} parent=1 // pred_region
      _
    $region21: #{multi_rd_forward.1} parent=1 // pred_fallthru
      _
    %v21 = vld [vmem:[%s4] sm:$0x3]
    %v22 = vld [vmem:[%s0] sm:$0xff]
    %v23 = vld [vmem:[%s0 + $0x8] sm:$0xff]
    %v24 = vld [vmem:[%s2] sm:$0x1]
    %v26 = vperm.slane %v24, 0
    %vm28 = vcmask 130048
    %v30 = vsel %vm28, %v21, 0
    %32 = vmatpush.msra.mxu0 0.0
    %33 = vmatpush.msra.mxu0 0.0
    %34 = vmatpush.msra.mxu0 0.0
    %35 = vmatpush.msra.mxu0 0.0
    %36 = vmatpush.msra.mxu0 0.0
    %37 = vmatpush.msra.mxu0 0.0
    %38 = vmatpush.msra.mxu0 0.0
    %39 = vmatpush.msra.mxu0 0.0
    %40 = vmatpush.msra.mxu0 0.0
    %41 = vmatpush.msra.mxu0 0.0
    %42 = vmatpush.msra.mxu0 0.0
    %43 = vmatpush.msra.mxu0 0.0
    %44 = vmatpush.msra.mxu0 0.0
    %45 = vmatpush.msra.mxu0 0.0
    %46 = vmatpush.msra.mxu0 %v23
    %47 = vmatpush.msra.mxu0 %v22
    %48 = vmatmul.f32.gmra.mxu0 %v30
    %v49 = vpop.f32.mrf.mxu0
    %v50 = vadd.f32 %v26, %v49
    %51 = vdwg.mxu0
    %v52 = vld [vmem:[%s1] sm:$0xff]
    %v53 = vld [vmem:[%s1 + $0x8] sm:$0xff]
    %v54 = vld [vmem:[%s3] sm:$0x1]
    %v56 = vperm.slane %v54, 0
    %58 = vmatpush.msra.mxu0 0.0
    %59 = vmatpush.msra.mxu0 0.0
    %60 = vmatpush.msra.mxu0 0.0
    %61 = vmatpush.msra.mxu0 0.0
    %62 = vmatpush.msra.mxu0 0.0
    %63 = vmatpush.msra.mxu0 0.0
    %64 = vmatpush.msra.mxu0 0.0
    %65 = vmatpush.msra.mxu0 0.0
    %66 = vmatpush.msra.mxu0 0.0
    %67 = vmatpush.msra.mxu0 0.0
    %68 = vmatpush.msra.mxu0 0.0
    %69 = vmatpush.msra.mxu0 0.0
    %70 = vmatpush.msra.mxu0 0.0
    %71 = vmatpush.msra.mxu0 0.0
    %72 = vmatpush.msra.mxu0 %v53
    %73 = vmatpush.msra.mxu0 %v52
    %74 = vmatmul.f32.gmra.mxu0 %v30
    %v75 = vpop.f32.mrf.mxu0
    %v76 = vadd.f32 %v56, %v75
    %77 = vdwg.mxu0
    %v78 = vtanh.pop %v50
    %v79 = vadd.f32 %v78, %v76
    %vm80 = vcmask 517120
    %81 = vst.msk [vmem:[#allocation2] sm:$0x3] %vm80, %v79
    // Predicated region
    $region22: #{multi_rd_forward.1} parent=1 // pred_check
      _
    $region23: #{multi_rd_forward.1} parent=1 // pred_check_branch
      %83 = sbr.rel (0) target = $region25
    $region24: #{multi_rd_forward.1} parent=1 // pred_region
      %85 = vsyncadd [#allocation3], 0
      %s87 = sshll.u32 [#allocation2], 4
      %s88 = int_to_ptr.vmem [resolvable:$true] %s87
      %s89 = sshll.u32 %s5, 4
      %s90 = int_to_ptr.hbm [resolvable:$true] %s89
      %92 = dma.vmem_to_hbm [thread:$0]  %s88, 32, %s90, [#allocation3]
    $region25: #{multi_rd_forward.1} parent=1 // pred_fallthru
      _
    // Predicated region
    $region26: #{multi_rd_forward.1} parent=1 // pred_check
      _
    $region27: #{multi_rd_forward.1} parent=1 // pred_check_branch
      %94 = sbr.rel (0) target = $region29
    $region28: #{multi_rd_forward.1} parent=1 // pred_region
      %96 = dma.done [#allocation3], 32
    $region29: #{multi_rd_forward.1} parent=1 // pred_fallthru
      _
    %97 = vsyncpa [#allocation3], 1

</llo_original>
